<compile_context>
chip_gen: v5e
topology: v5e:2x2
jax: 0.10.0
libtpu: 0.0.40
codegen_flags: <defaults>
</compile_context>

<pallas_src>
from functools import partial

import jax
import jax.numpy as jnp
import numpy as np
from jax import lax
from jax.experimental import pallas as pl
from jax.experimental.pallas import tpu as pltpu


def _make_kernel(ncv, pos_dim, emb_rows):
    D = pos_dim

    def kernel(x_ref, pos_ref, emb_ref, o_ref):
        # x_ref:   VMEM (TR, ncv*D)   rows of flattened x
        # pos_ref: VMEM (TR, 1) int32 clamped embedding index per row
        # emb_ref: VMEM (emb_rows, D) whole embedding table (resident)
        # o_ref:   VMEM (TR, ncv*D)
        tr = pos_ref.shape[0]
        # One-hot gather against the VMEM-resident table: exact row pick,
        # accumulated in f32 on the MXU (free under the DMA for this
        # HBM-bound add).
        onehot = (
            pos_ref[...] == lax.broadcasted_iota(jnp.int32, (tr, emb_rows), 1)
        ).astype(jnp.float32)
        pe = jnp.dot(
            onehot,
            emb_ref[...].astype(jnp.float32),
            preferred_element_type=jnp.float32,
        )  # (TR, D) f32

        if D % 128 == 0:
            # Lane-aligned chunks: unrolled static-slice adds (free ref views),
            # no block-sized tile temporary, minimal vst traffic.
            for c in range(ncv):
                sl = slice(c * D, (c + 1) * D)
                o_ref[:, sl] = (
                    x_ref[:, sl].astype(jnp.float32) + pe
                ).astype(o_ref.dtype)
        else:
            # D not lane-aligned: keep one fused ncv*D-wide store (lane-dense).
            add = jnp.tile(pe, (1, ncv)) if ncv > 1 else pe
            o_ref[...] = (x_ref[...].astype(jnp.float32) + add).astype(o_ref.dtype)

    return kernel


def _pick_row_tile(rows, cols, itemsize):
    """Row-tile TR: multiple of 8, ~1 MiB x-block, >=2 grid steps when possible."""
    if rows <= 8:
        return rows  # single block equal to the full (small) row extent
    target_bytes = 1 << 20  # ~1 MiB per x block -> ~85% of HBM roofline class
    tr = max(8, (target_bytes // max(1, cols * itemsize)) // 8 * 8)
    tr = min(tr, max(8, rows // 8 * 8))
    if rows // tr < 2:
        # Ensure >= 2 grid steps so v7x megacore can shard the parallel axis.
        tr = max(8, (rows // 2) // 8 * 8)
    return tr


@partial(jax.jit, static_argnames=("num_context_vectors", "max_seq_len", "donate_x"))
def cross_attn_history_pos_encoding(
    x, emb_weight, *, num_context_vectors, max_seq_len, donate_x=False
):
    """x: (B, B*ncv, D), emb_weight: (max_seq_len, D).

    donate_x=True aliases the output onto x's buffer inside the pallas_call;
    only use it when the caller also donates x (otherwise XLA inserts a copy).
    """
    B, L, D = x.shape
    ncv = num_context_vectors
    assert L == B * ncv, "x.shape[1] must equal x.shape[0] * num_context_vectors"

    # Mirror the PyTorch constructor: bump odd max_seq_len to even.
    if max_seq_len % 2 != 0:
        max_seq_len += 1
    halfpoint = max_seq_len // 2
    assert emb_weight.shape[0] == max_seq_len, (
        "embedding table rows must equal (even-bumped) max_seq_len"
    )
    assert emb_weight.shape[1] == D, "embedding dim must match x's last dim"
    emb_rows = emb_weight.shape[0]

    # Per-row clamped embedding index, flattened row-major over (i, j):
    # row r = i*B + j  ->  pos[r] = clamp(j - i + halfpoint, 0, max_seq_len-1).
    col = jnp.arange(B, dtype=jnp.int32)[None, :]
    row = jnp.arange(B, dtype=jnp.int32)[:, None]
    pos = jnp.clip(col - row + halfpoint, 0, max_seq_len - 1).reshape(B * B, 1)

    R, C = B * B, ncv * D
    x3 = x.reshape(R, C)  # pure row-major view; chunk c of a row is ctx-vec c
    out_dtype = jnp.promote_types(x.dtype, emb_weight.dtype)

    tr = _pick_row_tile(R, C, x.dtype.itemsize)
    grid = (pl.cdiv(R, tr),)

    io_aliases = {0: 0} if (donate_x and out_dtype == x.dtype) else {}

    bytes_accessed = (
        R * C * x.dtype.itemsize                     # read x
        + R * C * jnp.dtype(out_dtype).itemsize      # write out
        + emb_rows * D * emb_weight.dtype.itemsize   # embedding table (once)
        + R * 4                                      # pos indices
    )

    out = pl.pallas_call(
        _make_kernel(ncv, D, emb_rows),
        out_shape=jax.ShapeDtypeStruct((R, C), out_dtype),
        grid_spec=pltpu.PrefetchScalarGridSpec(
            num_scalar_prefetch=0,
            grid=grid,
            in_specs=[
                # Flattened x rows: (TR, ncv*D), lane dim = full last dim.
                pl.BlockSpec((tr, C), lambda t: (t, 0)),
                # Per-row embedding index: (TR, 1) int32.
                pl.BlockSpec((tr, 1), lambda t: (t, 0)),
                # Whole embedding table, VMEM-resident (constant index_map).
                pl.BlockSpec((emb_rows, D), lambda t: (0, 0)),
            ],
            out_specs=pl.BlockSpec((tr, C), lambda t: (t, 0)),
        ),
        compiler_params=pltpu.CompilerParams(
            dimension_semantics=("parallel",),
        ),
        cost_estimate=pl.CostEstimate(
            flops=R * C + 2 * R * emb_rows * D,
            transcendentals=0,
            bytes_accessed=int(bytes_accessed),
        ),
        input_output_aliases=io_aliases,
    )(x3, pos, emb_weight)

    return out.reshape(B, L, D)


if __name__ == "__main__":
    # Small, module-consistent shapes: B=4, num_context_vectors=2,
    # max_seq_len=8 (even), pos_dim=32  ->  x: (4, 8, 32)
    B = 4
    num_context_vectors = 2
    max_seq_len = 8
    pos_dim = 32

    key = jax.random.PRNGKey(0)
    k_x, k_emb = jax.random.split(key)
    x = jax.random.normal(k_x, (B, B * num_context_vectors, pos_dim), dtype=jnp.float32)
    # Deterministic "uniform_(-0.1, 0.1)" embedding init.
    emb_weight = jax.random.uniform(
        k_emb, (max_seq_len, pos_dim), minval=-0.1, maxval=0.1, dtype=jnp.float32
    )

    out = cross_attn_history_pos_encoding(
        x,
        emb_weight,
        num_context_vectors=num_context_vectors,
        max_seq_len=max_seq_len,
    )
    out = jax.block_until_ready(out)

    # Pure-JAX reference (mirrors the PyTorch forward exactly).
    halfpoint = max_seq_len // 2
    pm = jnp.clip(
        jnp.arange(B)[None, :] - jnp.arange(B)[:, None] + halfpoint, 0, max_seq_len - 1
    )
    pm_rep = jnp.repeat(pm, num_context_vectors, axis=1)  # (B, B*ncv)
    ref = x + emb_weight[pm_rep]

    np.testing.assert_allclose(np.asarray(out), np.asarray(ref), rtol=1e-6, atol=1e-6)
    print("KERNEL_OK")
</pallas_src>

<mosaic_0001>
module attributes {stable_mosaic.version = 11 : i64} {
  func.func @kernel(%arg0: i32, %arg1: memref<8x64xf32, #tpu.memory_space<vmem>>, %arg2: memref<8x1xi32, #tpu.memory_space<vmem>>, %arg3: memref<8x32xf32, #tpu.memory_space<vmem>>, %arg4: memref<8x64xf32, #tpu.memory_space<vmem>>) attributes {dimension_semantics = [#tpu.dimension_semantics<parallel>], iteration_bounds = array<i64: 2>, scalar_prefetch = 0 : i64, scratch_operands = 0 : i64, tpu.core_type = #tpu.core_type<tc>, window_params = [{transform_indices = @transform_0, window_bounds = array<i64: 8, 64>}, {transform_indices = @transform_1, window_bounds = array<i64: 8, 1>}, {pipeline_mode = #tpu.pipeline_mode<synchronous>, transform_indices = @transform_2, window_bounds = array<i64: 8, 32>}, {transform_indices = @transform_3, window_bounds = array<i64: 8, 64>}]} {
    %c0 = arith.constant 0 : index
    %c0_0 = arith.constant 0 : index
    %0 = vector.load %arg2[%c0, %c0_0] : memref<8x1xi32, #tpu.memory_space<vmem>>, vector<8x1xi32>
    %1 = tpu.iota {dimensions = array<i32: 1>} : vector<8x8xi32>
    %2 = vector.broadcast %0 : vector<8x1xi32> to vector<8x8xi32>
    %3 = arith.cmpi eq, %2, %1 : vector<8x8xi32>
    %4 = arith.extui %3 : vector<8x8xi1> to vector<8x8xi32>
    %5 = arith.sitofp %4 : vector<8x8xi32> to vector<8x8xf32>
    %c0_1 = arith.constant 0 : index
    %c0_2 = arith.constant 0 : index
    %6 = vector.load %arg3[%c0_1, %c0_2] : memref<8x32xf32, #tpu.memory_space<vmem>>, vector<8x32xf32>
    %cst = arith.constant dense<0.000000e+00> : vector<8x32xf32>
    %7 = tpu.matmul %5, %6, %cst {dimension_numbers = #tpu.dot_dimension_numbers<[1], [0], [0], [1], [0, 0, 1, 1], [], []>} : vector<8x8xf32>, vector<8x32xf32>, vector<8x32xf32> -> vector<8x32xf32>
    %8 = tpu.concatenate %7, %7 in 1 : vector<8x32xf32>, vector<8x32xf32> -> vector<8x64xf32>
    %c0_3 = arith.constant 0 : index
    %c0_4 = arith.constant 0 : index
    %9 = vector.load %arg1[%c0_3, %c0_4] : memref<8x64xf32, #tpu.memory_space<vmem>>, vector<8x64xf32>
    %10 = arith.addf %9, %8 : vector<8x64xf32>
    %c0_5 = arith.constant 0 : index
    %c0_6 = arith.constant 0 : index
    %11 = vector.load %arg4[%c0_5, %c0_6] : memref<8x64xf32, #tpu.memory_space<vmem>>, vector<8x64xf32>
    tpu.vector_store %arg4[%c0_5, %c0_6], %10 {strides = array<i32>} : memref<8x64xf32, #tpu.memory_space<vmem>>, vector<8x64xf32>,
    return
  }
  func.func @transform_0(%arg0: i32) -> (i32, i32) {
    %c0_i32 = arith.constant 0 : i32
    %c0_i32_0 = arith.constant 0 : i32
    return %arg0, %c0_i32 : i32, i32
  }
  func.func @transform_1(%arg0: i32) -> (i32, i32) {
    %c0_i32 = arith.constant 0 : i32
    %c0_i32_0 = arith.constant 0 : i32
    return %arg0, %c0_i32 : i32, i32
  }
  func.func @transform_2(%arg0: i32) -> (i32, i32) {
    %c0_i32 = arith.constant 0 : i32
    %c0_i32_0 = arith.constant 0 : i32
    %c0_i32_1 = arith.constant 0 : i32
    return %c0_i32, %c0_i32_0 : i32, i32
  }
  func.func @transform_3(%arg0: i32) -> (i32, i32) {
    %c0_i32 = arith.constant 0 : i32
    %c0_i32_0 = arith.constant 0 : i32
    return %arg0, %c0_i32 : i32, i32
  }
}

</mosaic_0001>

<llo_original>
// kernel: cross_attn_history_pos_encoding.1
$region0: #{cross_attn_history_pos_encoding.1}
  #allocation0 [shape = 'u32[]', space=smem, size = 0x4, offset = 0x4, fixed_abs, tag = 'smem constant byte address 0x4 - core index']
  #allocation1 [shape = 'u32[72,128]{1,0:T(1,128)}', space=vmem, size = 0x9000, scoped, tag = 'internal scratch']
  %s0 = inlined_call_operand.vmem [shape: f32[16,64], index: 0, kind: input, shape index: {}]
  %s1 = inlined_call_operand.vmem [shape: s32[16,1], index: 1, kind: input, shape index: {}]
  %s2 = inlined_call_operand.vmem [shape: f32[8,32], index: 2, kind: input, shape index: {}]
  %s3 = inlined_call_operand.vmem [shape: f32[16,64], index: 3, kind: output, shape index: {}]
  %s4 = sld [smem:[#allocation0]]
  $region45: #{cross_attn_history_pos_encoding.1} parent=0
    _
  %s6 = ssub.s32 1, %s4
  %s7 = scalar_select 0, %s6, %s4
  loop: start=0, step=1, limit=4
  $region2: #{cross_attn_history_pos_encoding.1} parent=0 // loop_pre_header
    _
  $region3: #{cross_attn_history_pos_encoding.1} parent=0 // loop_header
    %s9 = sphi 0, %s13
    %p10 = scmp.ge.s32.totalorder %s9, 4
    %s19 = sphi 0, %s21
    %s22 = sphi 0, %s19
    %s23 = sphi 0, %s22
    %s39 = sphi 0, %s23
    %s45 = sphi 0, %s47
    %s48 = sphi 0, %s45
    %s49 = sphi 0, %s48
    %s65 = sphi 0, %s49
    %s69 = sphi 0, %s69
    %s71 = sphi 0, %s69
    %s72 = sphi 0, %s71
    %s86 = sphi 0, %s72
    %s92 = sphi 0, %s94
    %s95 = sphi 0, %s92
    %s96 = sphi 0, %s95
    %s112 = sphi 0, %s96
  $region4: #{cross_attn_history_pos_encoding.1} parent=0 // loop_header_branch
    %12 = sbr.rel (%p10) target = $region8
  $region5: #{cross_attn_history_pos_encoding.1} parent=0 // loop_body
    %s14 = ssub.s32 %s9, 1
    %s15 = ssub.s32 %s9, 2
    %s16 = sadd.s32 %s9, 1
    %s17 = ssub.s32 %s9, %s16
    %p18 = scmp.eq.s32.totalorder %s17, 0
    %s20 = sadd.s32 %s19, 1
    %s21 = scalar_select %p18, %s19, %s20
    %p24 = pneg %p18
    %p25 = scmp.eq.s32.totalorder %s9, 1
    %p26 = por %p24, %p25
    %p27 = scmp.ne.s32.totalorder %s19, %s22
    %p28 = scmp.eq.s32.totalorder %s9, 0
    %p29 = por %p27, %p28
    %p30 = scmp.ne.s32.totalorder %s19, %s22
    %p31 = scmp.eq.s32.totalorder %s14, 1
    %p32 = por %p30, %p31
    %p33 = scmp.ne.s32.totalorder %s22, %s23
    %p34 = scmp.eq.s32.totalorder %s14, 0
    %p35 = por %p33, %p34
    %p36 = scmp.ne.s32.totalorder %s22, %s23
    %p37 = scmp.eq.s32.totalorder %s15, 1
    %p38 = por %p36, %p37
    %p40 = scmp.ne.s32.totalorder %s23, %s39
    %p41 = scmp.eq.s32.totalorder %s15, 0
    %p42 = por %p40, %p41
    %s43 = ssub.s32 %s9, %s16
    %p44 = scmp.eq.s32.totalorder %s43, 0
    %s46 = sadd.s32 %s45, 1
    %s47 = scalar_select %p44, %s45, %s46
    %p50 = pneg %p44
    %p51 = scmp.eq.s32.totalorder %s9, 1
    %p52 = por %p50, %p51
    %p53 = scmp.ne.s32.totalorder %s45, %s48
    %p54 = scmp.eq.s32.totalorder %s9, 0
    %p55 = por %p53, %p54
    %p56 = scmp.ne.s32.totalorder %s45, %s48
    %p57 = scmp.eq.s32.totalorder %s14, 1
    %p58 = por %p56, %p57
    %p59 = scmp.ne.s32.totalorder %s48, %s49
    %p60 = scmp.eq.s32.totalorder %s14, 0
    %p61 = por %p59, %p60
    %p62 = scmp.ne.s32.totalorder %s48, %s49
    %p63 = scmp.eq.s32.totalorder %s15, 1
    %p64 = por %p62, %p63
    %p66 = scmp.ne.s32.totalorder %s49, %s65
    %p67 = scmp.eq.s32.totalorder %s15, 0
    %p68 = por %p66, %p67
    %s70 = sadd.s32 %s69, 1
    %p73 = scmp.eq.s32.totalorder %s9, 1
    %p74 = scmp.ne.s32.totalorder %s69, %s71
    %p75 = scmp.eq.s32.totalorder %s9, 0
    %p76 = por %p74, %p75
    %p77 = scmp.ne.s32.totalorder %s69, %s71
    %p78 = scmp.eq.s32.totalorder %s14, 1
    %p79 = por %p77, %p78
    %p80 = scmp.ne.s32.totalorder %s71, %s72
    %p81 = scmp.eq.s32.totalorder %s14, 0
    %p82 = por %p80, %p81
    %p83 = scmp.ne.s32.totalorder %s71, %s72
    %p84 = scmp.eq.s32.totalorder %s15, 1
    %p85 = por %p83, %p84
    %p87 = scmp.ne.s32.totalorder %s72, %s86
    %p88 = scmp.eq.s32.totalorder %s15, 0
    %p89 = por %p87, %p88
    %s90 = ssub.s32 %s9, %s16
    %p91 = scmp.eq.s32.totalorder %s90, 0
    %s93 = sadd.s32 %s92, 1
    %s94 = scalar_select %p91, %s92, %s93
    %p97 = pneg %p91
    %p98 = scmp.eq.s32.totalorder %s9, 1
    %p99 = por %p97, %p98
    %p100 = scmp.ne.s32.totalorder %s92, %s95
    %p101 = scmp.eq.s32.totalorder %s9, 0
    %p102 = por %p100, %p101
    %p103 = scmp.ne.s32.totalorder %s92, %s95
    %p104 = scmp.eq.s32.totalorder %s14, 1
    %p105 = por %p103, %p104
    %p106 = scmp.ne.s32.totalorder %s95, %s96
    %p107 = scmp.eq.s32.totalorder %s14, 0
    %p108 = por %p106, %p107
    %p109 = scmp.ne.s32.totalorder %s95, %s96
    %p110 = scmp.eq.s32.totalorder %s15, 1
    %p111 = por %p109, %p110
    %p113 = scmp.ne.s32.totalorder %s96, %s112
    %p114 = scmp.eq.s32.totalorder %s15, 0
    %p115 = por %p113, %p114
    %p116 = scmp.le.s32.totalorder 1, %s9
    %p117 = scmp.lt.s32.totalorder %s9, 3
    %p118 = pnand %p116, %p117
    %p119 = pneg %p118
    // Predicated region
    $region9: #{cross_attn_history_pos_encoding.1} parent=5 // pred_check
      _
    $region10: #{cross_attn_history_pos_encoding.1} parent=5 // pred_check_branch
      %121 = sbr.rel (%p118) target = $region12
    $region11: #{cross_attn_history_pos_encoding.1} parent=5 // pred_region
      %s122 = ssub.s32 %s9, 1
      // Predicated region
      $region13: #{cross_attn_history_pos_encoding.1} parent=11 // pred_check
        %p123 = pneg %p82
      $region14: #{cross_attn_history_pos_encoding.1} parent=11 // pred_check_branch
        %125 = sbr.rel (%p123) target = $region16
      $region15: #{cross_attn_history_pos_encoding.1} parent=11 // pred_region
        _
      $region16: #{cross_attn_history_pos_encoding.1} parent=11 // pred_fallthru
        _
    $region12: #{cross_attn_history_pos_encoding.1} parent=5 // pred_fallthru
      _
    %p126 = scmp.lt.s32.totalorder %s9, 2
    // Predicated region
    $region17: #{cross_attn_history_pos_encoding.1} parent=5 // pred_check
      %p127 = pneg %p126
    $region18: #{cross_attn_history_pos_encoding.1} parent=5 // pred_check_branch
      %129 = sbr.rel (%p127) target = $region20
    $region19: #{cross_attn_history_pos_encoding.1} parent=5 // pred_region
      // Predicated region
      $region21: #{cross_attn_history_pos_encoding.1} parent=19 // pred_check
        %p130 = pneg %p29
      $region22: #{cross_attn_history_pos_encoding.1} parent=19 // pred_check_branch
        %132 = sbr.rel (%p130) target = $region24
      $region23: #{cross_attn_history_pos_encoding.1} parent=19 // pred_region
        %p133 = scmp.lt.s32.totalorder %s9, 1
        %s134 = scalar_select %p133, %s9, 1
        %s135 = smul.addr %s134, 8
        %s136 = scalar_lea.vmem %s0, %s135
      $region24: #{cross_attn_history_pos_encoding.1} parent=19 // pred_fallthru
        _
      // Predicated region
      $region25: #{cross_attn_history_pos_encoding.1} parent=19 // pred_check
        %p137 = pneg %p55
      $region26: #{cross_attn_history_pos_encoding.1} parent=19 // pred_check_branch
        %139 = sbr.rel (%p137) target = $region28
      $region27: #{cross_attn_history_pos_encoding.1} parent=19 // pred_region
        %p140 = scmp.lt.s32.totalorder %s9, 1
        %s141 = scalar_select %p140, %s9, 1
        %s142 = smul.addr %s141, 8
        %s143 = scalar_lea.vmem %s1, %s142
      $region28: #{cross_attn_history_pos_encoding.1} parent=19 // pred_fallthru
        _
    $region20: #{cross_attn_history_pos_encoding.1} parent=5 // pred_fallthru
      _
    %p144 = scmp.le.s32.totalorder 1, %s9
    %p145 = scmp.lt.s32.totalorder %s9, 3
    %p146 = pnand %p144, %p145
    %p147 = pneg %p146
    // Predicated region
    $region29: #{cross_attn_history_pos_encoding.1} parent=5 // pred_check
      _
    $region30: #{cross_attn_history_pos_encoding.1} parent=5 // pred_check_branch
      %149 = sbr.rel (%p146) target = $region32
    $region31: #{cross_attn_history_pos_encoding.1} parent=5 // pred_region
      %s150 = ssub.s32 %s9, 1
      %p151 = scmp.lt.s32.totalorder %s14, 1
      %s152 = scalar_select %p151, %s14, 1
      %s153 = smul.addr %s152, 8
      %s154 = scalar_lea.vmem %s0, %s153
      %p155 = pneg %p35
      %p156 = pneg %p32
      %p157 = scmp.lt.s32.totalorder %s14, 1
      %s158 = scalar_select %p157, %s14, 1
      %s159 = smul.addr %s158, 8
      %s160 = scalar_lea.vmem %s1, %s159
      %p161 = pneg %p61
      %p162 = pneg %p58
      %p163 = pneg %p82
      %p164 = pneg %p79
      %p165 = pneg %p108
      %p166 = pneg %p105
      %p167 = scmp.lt.s32.totalorder %s14, 1
      %s168 = scalar_select %p167, %s14, 1
      %s169 = smul.addr %s168, 8
      %s170 = scalar_lea.vmem %s3, %s169
      %p171 = scmp.lt.s32.totalorder %s14, 1
      %s172 = scalar_select %p171, %s14, 1
      %s173 = smul.addr %s172, 8
      %s174 = scalar_lea.vmem %s0, %s173
      %p175 = scmp.lt.s32.totalorder %s14, 1
      %s176 = scalar_select %p175, %s14, 1
      %s177 = smul.addr %s176, 8
      %s178 = scalar_lea.vmem %s1, %s177
      %p179 = scmp.lt.s32.totalorder %s14, 1
      %s180 = scalar_select %p179, %s14, 1
      %s181 = smul.addr %s180, 8
      %s182 = scalar_lea.vmem %s3, %s181
      %v183 = vld [vmem:[%s178] sm:$0xff]
      %v184 = vlaneseq
      %v185 = vand.u32 %v184, 127
      %186 = vset.pattern.permute.xlu0 0
      %187 = vperm.xlu0 %186, %v183
      %v188 = vpop.permute.xlu0 %187
      %vm189 = vcmp.eq.s32.totalorder %v188, %v185
      %v190 = vsel %vm189, 1, 0
      %v191 = vcvt.s32.f32 %v190
      %v192 = vld [vmem:[%s2] sm:$0xff]
      %vm193 = vcmask 64512
      %v195 = vsel %vm193, %v191, 0
      %197 = vmatpush.msra.mxu0 0.0
      %198 = vmatpush.msra.mxu0 0.0
      %199 = vmatpush.msra.mxu0 0.0
      %200 = vmatpush.msra.mxu0 0.0
      %201 = vmatpush.msra.mxu0 0.0
      %202 = vmatpush.msra.mxu0 0.0
      %203 = vmatpush.msra.mxu0 0.0
      %204 = vmatpush.msra.mxu0 0.0
      %205 = vmatpush.msra.mxu0 0.0
      %206 = vmatpush.msra.mxu0 0.0
      %207 = vmatpush.msra.mxu0 0.0
      %208 = vmatpush.msra.mxu0 0.0
      %209 = vmatpush.msra.mxu0 0.0
      %210 = vmatpush.msra.mxu0 0.0
      %211 = vmatpush.msra.mxu0 0.0
      %212 = vmatpush.msra.mxu0 %v192
      %213 = vmatmul.f32.gmra.mxu0 %v195
      %v214 = vpop.f32.mrf.mxu0
      %v215 = vadd.f32 0.0, %v214
      %216 = vdwg.mxu0
      %218 = vrot.lane.b32.xlu0 %v215, 32
      %v219 = vpop.permute.xlu0 %218
      %vm221 = vcmask 261120
      %v222 = vsel %vm221, %v215, %v219
      %v223 = vld [vmem:[%s174] sm:$0xff]
      %v224 = vadd.f32 %v223, %v222
      %vm225 = vcmask 523264
      %226 = vst.msk [vmem:[%s182] sm:$0xff] %vm225, %v224
      %p227 = scmp.lt.s32.totalorder %s14, 1
      %s228 = scalar_select %p227, %s14, 1
      %s229 = smul.addr %s228, 8
      %s230 = scalar_lea.vmem %s3, %s229
      // Predicated region
      $region33: #{cross_attn_history_pos_encoding.1} parent=31 // pred_check
        %p231 = pneg %p105
      $region34: #{cross_attn_history_pos_encoding.1} parent=31 // pred_check_branch
        %233 = sbr.rel (%p231) target = $region36
      $region35: #{cross_attn_history_pos_encoding.1} parent=31 // pred_region
        _
      $region36: #{cross_attn_history_pos_encoding.1} parent=31 // pred_fallthru
        _
    $region32: #{cross_attn_history_pos_encoding.1} parent=5 // pred_fallthru
      _
    %p234 = scmp.le.s32.totalorder 2, %s9
    // Predicated region
    $region37: #{cross_attn_history_pos_encoding.1} parent=5 // pred_check
      %p235 = pneg %p234
    $region38: #{cross_attn_history_pos_encoding.1} parent=5 // pred_check_branch
      %237 = sbr.rel (%p235) target = $region40
    $region39: #{cross_attn_history_pos_encoding.1} parent=5 // pred_region
      %s238 = ssub.s32 %s9, 2
      // Predicated region
      $region41: #{cross_attn_history_pos_encoding.1} parent=39 // pred_check
        %p239 = pneg %p111
      $region42: #{cross_attn_history_pos_encoding.1} parent=39 // pred_check_branch
        %241 = sbr.rel (%p239) target = $region44
      $region43: #{cross_attn_history_pos_encoding.1} parent=39 // pred_region
        %p242 = scmp.lt.s32.totalorder %s15, 1
        %s243 = scalar_select %p242, %s15, 1
        %s244 = smul.addr %s243, 8
        %s245 = scalar_lea.vmem %s3, %s244
      $region44: #{cross_attn_history_pos_encoding.1} parent=39 // pred_fallthru
        _
    $region40: #{cross_attn_history_pos_encoding.1} parent=5 // pred_fallthru
      _
  $region6: #{cross_attn_history_pos_encoding.1} parent=0 // loop_footer
    %s13 = sadd.s32 1, %s9
  $region7: #{cross_attn_history_pos_encoding.1} parent=0 // loop_footer_branch
    %8 = sbr.rel target = $region3
  $region8: #{cross_attn_history_pos_encoding.1} parent=0 // loop_exit
    _

</llo_original>
